<compile_context>
chip_gen: v7x
topology: tpu7x:2x2x1
jax: 0.10.0
libtpu: 0.0.40
codegen_flags: <defaults>
</compile_context>

<pallas_src>
import functools

import jax
import jax.numpy as jnp
from jax.experimental import pallas as pl
from jax.experimental.pallas import tpu as pltpu

_VMEM = pl.BlockSpec(memory_space=pltpu.MemorySpace.VMEM)
_F32 = jnp.float32
_BF16 = jnp.bfloat16


# ----------------------------- Pallas kernel -------------------------------

def _log_softmax(y):
    m = jnp.max(y, axis=-1, keepdims=True)
    s = y - m
    return s - jnp.log(jnp.sum(jnp.exp(s), axis=-1, keepdims=True))


def _fused_forward_kernel(a_code_ref, x_code_ref, a_trans_ref, x_trans_ref,
                          batch_ref, sel_ref,
                          cw1_ref, cw2_ref, tw1_ref, tw2_ref,
                          head_w_ref, bias_ref,
                          out_ref):
    """Whole forward pass in one kernel; intermediates never leave VMEM."""
    dot = functools.partial(jnp.dot, preferred_element_type=_F32)

    n_code = a_code_ref.shape[0]
    n_trans = a_trans_ref.shape[0]
    g = sel_ref.shape[0]
    code_hid = cw1_ref.shape[1]
    trans_hid = tw1_ref.shape[1]
    out_size = cw2_ref.shape[1]
    fsz = head_w_ref.shape[2] // 2

    # Packed biases: one lane-dense [8, 128] load, static value slices.
    biases = bias_ref[...]
    cb1 = biases[0:1, :code_hid]
    cb2 = biases[1:2, :out_size]
    tb1 = biases[2:3, :trans_hid]
    tb2 = biases[3:4, :out_size]
    l1b = biases[4:5, :fsz]
    lb = biases[5:6, :fsz]

    def norm_adj(a_ref, n):
        # D^-1/2 (A + I) D^-1/2, computed in f32, emitted as bf16 for the MXU.
        r = jax.lax.broadcasted_iota(jnp.int32, (n, n), 0)
        c = jax.lax.broadcasted_iota(jnp.int32, (n, n), 1)
        a = a_ref[...] + (r == c).astype(_F32)
        # A is symmetric (standard GCN assumption, true by construction here),
        # so row-sum == col-sum; using both axes avoids an in-kernel transpose.
        dr = jax.lax.rsqrt(jnp.sum(a, axis=1, keepdims=True))   # [n, 1]
        dc = jax.lax.rsqrt(jnp.sum(a, axis=0, keepdims=True))   # [1, n]
        return (a * dr * dc).astype(_BF16)

    # ---- code branch: 2-layer GCN -> code_emb [n_code, out_size]
    a_c = norm_adj(a_code_ref, n_code)
    ax = dot(a_c, x_code_ref[...].astype(_BF16))                 # (A@X) first: F_in < hidden
    h = jnp.maximum(dot(ax.astype(_BF16), cw1_ref[...]) + cb1, 0.0)
    code_emb = dot(a_c, dot(h.astype(_BF16), cw2_ref[...]).astype(_BF16)) + cb2

    # ---- trans branch: 2-layer GCN + in-kernel mean pooling -> [g, out_size]
    a_t = norm_adj(a_trans_ref, n_trans)
    ax = dot(a_t, x_trans_ref[...].astype(_BF16))
    h = jnp.maximum(dot(ax.astype(_BF16), tw1_ref[...]) + tb1, 0.0)
    h = dot(a_t, dot(h.astype(_BF16), tw2_ref[...]).astype(_BF16)) + tb2

    gid = jax.lax.broadcasted_iota(jnp.int32, (g, n_trans), 0)
    pool = (gid == batch_ref[...]).astype(_F32)                  # [g, n_trans]
    pool = pool / jnp.maximum(jnp.sum(pool, axis=-1, keepdims=True), 1.0)
    trans_emb = dot(pool.astype(_BF16), h.astype(_BF16))         # [g, out_size]

    # ---- code_emb[mask]: one-hot select matmul (sel built host-side)
    code_sel = dot(sel_ref[...].astype(_BF16), code_emb.astype(_BF16))

    # ---- fused heads: one MXU matmul per embedding -> [g, 2*final]
    #   head_w[0] = [linear_one.W | linear.W[:out]]   (applied to code_sel)
    #   head_w[1] = [linear_one.W | linear.W[out:]]   (applied to trans_emb)
    yc = dot(code_sel.astype(_BF16), head_w_ref[0])
    yt = dot(trans_emb.astype(_BF16), head_w_ref[1])
    y_code = yc[:, :fsz] + l1b
    y_trans = yt[:, :fsz] + l1b
    y_final = yc[:, fsz:] + yt[:, fsz:] + lb

    # Single packed output (3*g, final); one store, one writeback DMA.
    out_ref[...] = _log_softmax(jnp.concatenate([y_code, y_trans, y_final], axis=0))


def fused_forward(a_code, x_code, a_trans, x_trans, batch2d, sel,
                  cw1, cw2, tw1, tw2, head_w, bias_pack):
    nc, nt, g = a_code.shape[0], a_trans.shape[0], sel.shape[0]
    fc, ft = x_code.shape[1], x_trans.shape[1]
    hc, ht, o = cw1.shape[1], tw1.shape[1], cw2.shape[1]
    f2 = head_w.shape[2]
    fsz = f2 // 2

    args = (a_code, x_code, a_trans, x_trans, batch2d, sel,
            cw1, cw2, tw1, tw2, head_w, bias_pack)

    flops = 2 * (nc * nc * fc + nc * fc * hc + nc * hc * o + nc * nc * o
                 + nt * nt * ft + nt * ft * ht + nt * ht * o + nt * nt * o
                 + g * nt * o + g * nc * o + 2 * g * o * f2)
    bytes_accessed = sum(int(a.size) * a.dtype.itemsize for a in args) + 3 * g * fsz * 4

    return pl.pallas_call(
        _fused_forward_kernel,
        out_shape=jax.ShapeDtypeStruct((3 * g, fsz), _F32),
        in_specs=[_VMEM] * len(args),
        out_specs=_VMEM,
        cost_estimate=pl.CostEstimate(flops=flops,
                                      transcendentals=3 * g * fsz + 3 * g,
                                      bytes_accessed=bytes_accessed),
    )(*args)


# ------------------------------- glue (JAX) --------------------------------

def glorot(key, shape):
    fan_in, fan_out = shape
    lim = (6.0 / (fan_in + fan_out)) ** 0.5
    return jax.random.uniform(key, shape, _F32, -lim, lim)


def init_params(key, trans_in, trans_hid, code_in, code_hid, out_size, final_size):
    ks = jax.random.split(key, 8)
    return {
        # GCN_Net (transaction graphs), 2 layers
        "trans_w1": glorot(ks[0], (trans_in, trans_hid)),
        "trans_b1": jnp.zeros((trans_hid,), _F32),
        "trans_w2": glorot(ks[1], (trans_hid, out_size)),
        "trans_b2": jnp.zeros((out_size,), _F32),
        # GCN_Net_1 (code graph), 2 layers
        "code_w1": glorot(ks[2], (code_in, code_hid)),
        "code_b1": jnp.zeros((code_hid,), _F32),
        "code_w2": glorot(ks[3], (code_hid, out_size)),
        "code_b2": jnp.zeros((out_size,), _F32),
        # linear_one: Linear(out_size, final_size); stored pre-transposed [in, out]
        "lin1_w": glorot(ks[4], (out_size, final_size)),
        "lin1_b": glorot(ks[5], (1, final_size)).reshape(-1),
        # linear: Linear(2*out_size, final_size)
        "lin_w": glorot(ks[6], (2 * out_size, final_size)),
        "lin_b": glorot(ks[7], (1, final_size)).reshape(-1),
    }


def prepare_params(params):
    """One-time packing/casting — hoisted out of the per-call hot path."""
    out_size, final_size = params["lin1_w"].shape
    code_hid = params["code_w1"].shape[1]
    trans_hid = params["trans_w1"].shape[1]

    lane_w = max(128, code_hid, trans_hid, out_size, final_size)
    bias_pack = jnp.zeros((8, lane_w), _F32)
    bias_pack = bias_pack.at[0, :code_hid].set(params["code_b1"])
    bias_pack = bias_pack.at[1, :out_size].set(params["code_b2"])
    bias_pack = bias_pack.at[2, :trans_hid].set(params["trans_b1"])
    bias_pack = bias_pack.at[3, :out_size].set(params["trans_b2"])
    bias_pack = bias_pack.at[4, :final_size].set(params["lin1_b"])
    bias_pack = bias_pack.at[5, :final_size].set(params["lin_b"])

    lwc = params["lin_w"][:out_size]      # half applied to code_emb[mask]
    lwt = params["lin_w"][out_size:]      # half applied to trans_emb
    head_w = jnp.stack(
        [jnp.concatenate([params["lin1_w"], lwc], axis=1),
         jnp.concatenate([params["lin1_w"], lwt], axis=1)],
        axis=0).astype(_BF16)             # [2, out_size, 2*final_size]

    return {
        "cw1": params["code_w1"].astype(_BF16),
        "cw2": params["code_w2"].astype(_BF16),
        "tw1": params["trans_w1"].astype(_BF16),
        "tw2": params["trans_w2"].astype(_BF16),
        "head_w": head_w,
        "bias_pack": bias_pack,
    }


def build_select_matrix(mask_idx, n_code):
    """One-hot select matrix for code_emb[mask]; built once per batch."""
    mi = jnp.asarray(mask_idx, jnp.int32)
    # PyTorch advanced indexing would raise on out-of-range indices; the
    # one-hot matmul would silently produce zero rows, so validate host-side.
    assert int(jnp.min(mi)) >= 0 and int(jnp.max(mi)) < n_code, "mask index OOB"
    return (mi[:, None] == jnp.arange(n_code, dtype=jnp.int32)[None, :]).astype(_F32)


def select_mask(masks, num_graphs):
    # Mirrors the batch-size gated mask selection of the PyTorch module.
    if num_graphs == 256:
        return masks["train"]
    if num_graphs == 64:
        return masks["val"]
    if num_graphs == 80:
        return masks["test"]
    # TODO(synk): original only defines masks for 256/64/80; fallback for the
    # small synthetic batch used here.
    return masks["default"]


@jax.jit
def forward(prep, trans_x, trans_adj, trans_batch2d, code_x, code_adj, sel):
    """Mirrors All_Concat_model_GCN_GCN_test.forward (inference)."""
    packed = fused_forward(
        code_adj, code_x, trans_adj, trans_x, trans_batch2d, sel,
        prep["cw1"], prep["cw2"], prep["tw1"], prep["tw2"],
        prep["head_w"], prep["bias_pack"])
    g = sel.shape[0]
    return packed[:g], packed[g:2 * g], packed[2 * g:]


# ---------------------------------- main -----------------------------------

if __name__ == "__main__":
    key = jax.random.PRNGKey(0)
    k_par, k_tx, k_ta, k_cx, k_ca = jax.random.split(key, 5)

    # sizes
    trans_input_size, trans_hidden = 8, 32
    code_input_size, code_hidden = 10, 32
    output_size, final_size = 16, 4
    num_graphs, nodes_per_graph = 2, 8         # 2 transaction graphs x 8 nodes
    n_trans = num_graphs * nodes_per_graph     # 16 nodes total
    n_code = 12                                # code graph nodes

    params = init_params(k_par, trans_input_size, trans_hidden,
                         code_input_size, code_hidden, output_size, final_size)
    prep = prepare_params(params)              # one-time, outside the hot path

    # transaction graphs (dense batch)
    trans_x = jax.random.normal(k_tx, (n_trans, trans_input_size), _F32)
    ta = jax.random.bernoulli(k_ta, 0.3, (n_trans, n_trans))
    trans_adj = jnp.maximum(ta, ta.T).astype(_F32)
    trans_batch = jnp.repeat(jnp.arange(num_graphs, dtype=jnp.int32), nodes_per_graph)
    trans_batch2d = trans_batch.reshape(1, -1)           # kernel-ready [1, n_trans]

    # code graph
    code_x = jax.random.normal(k_cx, (n_code, code_input_size), _F32)
    ca = jax.random.bernoulli(k_ca, 0.3, (n_code, n_code))
    code_adj = jnp.maximum(ca, ca.T).astype(_F32)

    masks = {
        "train": jnp.array([0, 1], dtype=jnp.int32),
        "val": jnp.array([2, 3], dtype=jnp.int32),
        "test": jnp.array([4, 5], dtype=jnp.int32),
        "default": jnp.array([3, 7], dtype=jnp.int32),   # picks num_graphs code nodes
    }

    # num_graphs is known statically from batch construction -> no host readback.
    mask_idx = select_mask(masks, num_graphs)
    sel = build_select_matrix(mask_idx, n_code)          # once per batch

    code_prob, trans_prob, final_prob = forward(
        prep, trans_x, trans_adj, trans_batch2d, code_x, code_adj, sel)
    jax.block_until_ready((code_prob, trans_prob, final_prob))

    # sanity: log_softmax rows exponentiate to probability distributions
    assert code_prob.shape == (num_graphs, final_size)
    assert trans_prob.shape == (num_graphs, final_size)
    assert final_prob.shape == (num_graphs, final_size)
    assert bool(jnp.all(jnp.abs(jnp.exp(code_prob).sum(-1) - 1.0) < 1e-3))
    assert bool(jnp.all(jnp.abs(jnp.exp(trans_prob).sum(-1) - 1.0) < 1e-3))
    assert bool(jnp.all(jnp.abs(jnp.exp(final_prob).sum(-1) - 1.0) < 1e-3))

    print("KERNEL_OK")
</pallas_src>

<mosaic_0001>
module attributes {stable_mosaic.version = 11 : i64} {
  func.func @_fused_forward_kernel(%arg0: memref<12x12xf32, #tpu.memory_space<vmem>>, %arg1: memref<12x10xf32, #tpu.memory_space<vmem>>, %arg2: memref<16x16xf32, #tpu.memory_space<vmem>>, %arg3: memref<16x8xf32, #tpu.memory_space<vmem>>, %arg4: memref<1x16xi32, #tpu.memory_space<vmem>>, %arg5: memref<2x12xf32, #tpu.memory_space<vmem>>, %arg6: memref<10x32xbf16, #tpu.memory_space<vmem>>, %arg7: memref<32x16xbf16, #tpu.memory_space<vmem>>, %arg8: memref<8x32xbf16, #tpu.memory_space<vmem>>, %arg9: memref<32x16xbf16, #tpu.memory_space<vmem>>, %arg10: memref<2x16x8xbf16, #tpu.memory_space<vmem>>, %arg11: memref<8x128xf32, #tpu.memory_space<vmem>>, %arg12: memref<6x4xf32, #tpu.memory_space<vmem>>) attributes {dimension_semantics = [], scalar_prefetch = 0 : i64, scratch_operands = 0 : i64, tpu.core_type = #tpu.core_type<tc>} {
    %c0 = arith.constant 0 : index
    %c0_0 = arith.constant 0 : index
    %0 = vector.load %arg11[%c0, %c0_0] : memref<8x128xf32, #tpu.memory_space<vmem>>, vector<8x128xf32>
    %1 = vector.extract_strided_slice %0 {offsets = [0, 0], sizes = [1, 32], strides = [1, 1]} : vector<8x128xf32> to vector<1x32xf32>
    %2 = vector.extract_strided_slice %0 {offsets = [1, 0], sizes = [1, 16], strides = [1, 1]} : vector<8x128xf32> to vector<1x16xf32>
    %3 = vector.extract_strided_slice %0 {offsets = [2, 0], sizes = [1, 32], strides = [1, 1]} : vector<8x128xf32> to vector<1x32xf32>
    %4 = vector.extract_strided_slice %0 {offsets = [3, 0], sizes = [1, 16], strides = [1, 1]} : vector<8x128xf32> to vector<1x16xf32>
    %5 = vector.extract_strided_slice %0 {offsets = [4, 0], sizes = [1, 4], strides = [1, 1]} : vector<8x128xf32> to vector<1x4xf32>
    %6 = vector.extract_strided_slice %0 {offsets = [5, 0], sizes = [1, 4], strides = [1, 1]} : vector<8x128xf32> to vector<1x4xf32>
    %7 = tpu.iota {dimensions = array<i32: 0>} : vector<12x12xi32>
    %8 = tpu.iota {dimensions = array<i32: 1>} : vector<12x12xi32>
    %c0_1 = arith.constant 0 : index
    %c0_2 = arith.constant 0 : index
    %9 = vector.load %arg0[%c0_1, %c0_2] : memref<12x12xf32, #tpu.memory_space<vmem>>, vector<12x12xf32>
    %10 = arith.cmpi eq, %7, %8 : vector<12x12xi32>
    %11 = arith.extui %10 : vector<12x12xi1> to vector<12x12xi32>
    %12 = arith.sitofp %11 : vector<12x12xi32> to vector<12x12xf32>
    %13 = arith.addf %9, %12 : vector<12x12xf32>
    %cst = arith.constant dense<0.000000e+00> : vector<12xf32>
    %14 = vector.multi_reduction <add>, %13, %cst [1] : vector<12x12xf32> to vector<12xf32>
    %15 = vector.shape_cast %14 : vector<12xf32> to vector<12x1xf32>
    %16 = math.rsqrt %15 : vector<12x1xf32>
    %cst_3 = arith.constant dense<0.000000e+00> : vector<12xf32>
    %17 = vector.multi_reduction <add>, %13, %cst_3 [0] : vector<12x12xf32> to vector<12xf32>
    %18 = vector.shape_cast %17 : vector<12xf32> to vector<1x12xf32>
    %19 = math.rsqrt %18 : vector<1x12xf32>
    %20 = vector.broadcast %16 : vector<12x1xf32> to vector<12x12xf32>
    %21 = arith.mulf %13, %20 : vector<12x12xf32>
    %22 = vector.broadcast %19 : vector<1x12xf32> to vector<12x12xf32>
    %23 = arith.mulf %21, %22 : vector<12x12xf32>
    %24 = arith.truncf %23 : vector<12x12xf32> to vector<12x12xbf16>
    %c0_4 = arith.constant 0 : index
    %c0_5 = arith.constant 0 : index
    %25 = vector.load %arg1[%c0_4, %c0_5] : memref<12x10xf32, #tpu.memory_space<vmem>>, vector<12x10xf32>
    %26 = arith.truncf %25 : vector<12x10xf32> to vector<12x10xbf16>
    %cst_6 = arith.constant dense<0.000000e+00> : vector<12x10xf32>
    %27 = tpu.matmul %24, %26, %cst_6 {dimension_numbers = #tpu.dot_dimension_numbers<[1], [0], [0], [1], [0, 0, 1, 1], [], []>} : vector<12x12xbf16>, vector<12x10xbf16>, vector<12x10xf32> -> vector<12x10xf32>
    %28 = arith.truncf %27 : vector<12x10xf32> to vector<12x10xbf16>
    %c0_7 = arith.constant 0 : index
    %c0_8 = arith.constant 0 : index
    %29 = vector.load %arg6[%c0_7, %c0_8] : memref<10x32xbf16, #tpu.memory_space<vmem>>, vector<10x32xbf16>
    %cst_9 = arith.constant dense<0.000000e+00> : vector<12x32xf32>
    %30 = tpu.matmul %28, %29, %cst_9 {dimension_numbers = #tpu.dot_dimension_numbers<[1], [0], [0], [1], [0, 0, 1, 1], [], []>} : vector<12x10xbf16>, vector<10x32xbf16>, vector<12x32xf32> -> vector<12x32xf32>
    %31 = vector.broadcast %1 : vector<1x32xf32> to vector<12x32xf32>
    %32 = arith.addf %30, %31 : vector<12x32xf32>
    %cst_10 = arith.constant 0.000000e+00 : f32
    %33 = vector.broadcast %cst_10 : f32 to vector<12x32xf32>
    %34 = arith.maximumf %32, %33 : vector<12x32xf32>
    %35 = arith.truncf %34 : vector<12x32xf32> to vector<12x32xbf16>
    %c0_11 = arith.constant 0 : index
    %c0_12 = arith.constant 0 : index
    %36 = vector.load %arg7[%c0_11, %c0_12] : memref<32x16xbf16, #tpu.memory_space<vmem>>, vector<32x16xbf16>
    %cst_13 = arith.constant dense<0.000000e+00> : vector<12x16xf32>
    %37 = tpu.matmul %35, %36, %cst_13 {dimension_numbers = #tpu.dot_dimension_numbers<[1], [0], [0], [1], [0, 0, 1, 1], [], []>} : vector<12x32xbf16>, vector<32x16xbf16>, vector<12x16xf32> -> vector<12x16xf32>
    %38 = arith.truncf %37 : vector<12x16xf32> to vector<12x16xbf16>
    %cst_14 = arith.constant dense<0.000000e+00> : vector<12x16xf32>
    %39 = tpu.matmul %24, %38, %cst_14 {dimension_numbers = #tpu.dot_dimension_numbers<[1], [0], [0], [1], [0, 0, 1, 1], [], []>} : vector<12x12xbf16>, vector<12x16xbf16>, vector<12x16xf32> -> vector<12x16xf32>
    %40 = vector.broadcast %2 : vector<1x16xf32> to vector<12x16xf32>
    %41 = arith.addf %39, %40 : vector<12x16xf32>
    %42 = tpu.iota {dimensions = array<i32: 0>} : vector<16x16xi32>
    %43 = tpu.iota {dimensions = array<i32: 1>} : vector<16x16xi32>
    %c0_15 = arith.constant 0 : index
    %c0_16 = arith.constant 0 : index
    %44 = vector.load %arg2[%c0_15, %c0_16] : memref<16x16xf32, #tpu.memory_space<vmem>>, vector<16x16xf32>
    %45 = arith.cmpi eq, %42, %43 : vector<16x16xi32>
    %46 = arith.extui %45 : vector<16x16xi1> to vector<16x16xi32>
    %47 = arith.sitofp %46 : vector<16x16xi32> to vector<16x16xf32>
    %48 = arith.addf %44, %47 : vector<16x16xf32>
    %cst_17 = arith.constant dense<0.000000e+00> : vector<16xf32>
    %49 = vector.multi_reduction <add>, %48, %cst_17 [1] : vector<16x16xf32> to vector<16xf32>
    %50 = vector.shape_cast %49 : vector<16xf32> to vector<16x1xf32>
    %51 = math.rsqrt %50 : vector<16x1xf32>
    %cst_18 = arith.constant dense<0.000000e+00> : vector<16xf32>
    %52 = vector.multi_reduction <add>, %48, %cst_18 [0] : vector<16x16xf32> to vector<16xf32>
    %53 = vector.shape_cast %52 : vector<16xf32> to vector<1x16xf32>
    %54 = math.rsqrt %53 : vector<1x16xf32>
    %55 = vector.broadcast %51 : vector<16x1xf32> to vector<16x16xf32>
    %56 = arith.mulf %48, %55 : vector<16x16xf32>
    %57 = vector.broadcast %54 : vector<1x16xf32> to vector<16x16xf32>
    %58 = arith.mulf %56, %57 : vector<16x16xf32>
    %59 = arith.truncf %58 : vector<16x16xf32> to vector<16x16xbf16>
    %c0_19 = arith.constant 0 : index
    %c0_20 = arith.constant 0 : index
    %60 = vector.load %arg3[%c0_19, %c0_20] : memref<16x8xf32, #tpu.memory_space<vmem>>, vector<16x8xf32>
    %61 = arith.truncf %60 : vector<16x8xf32> to vector<16x8xbf16>
    %cst_21 = arith.constant dense<0.000000e+00> : vector<16x8xf32>
    %62 = tpu.matmul %59, %61, %cst_21 {dimension_numbers = #tpu.dot_dimension_numbers<[1], [0], [0], [1], [0, 0, 1, 1], [], []>} : vector<16x16xbf16>, vector<16x8xbf16>, vector<16x8xf32> -> vector<16x8xf32>
    %63 = arith.truncf %62 : vector<16x8xf32> to vector<16x8xbf16>
    %c0_22 = arith.constant 0 : index
    %c0_23 = arith.constant 0 : index
    %64 = vector.load %arg8[%c0_22, %c0_23] : memref<8x32xbf16, #tpu.memory_space<vmem>>, vector<8x32xbf16>
    %cst_24 = arith.constant dense<0.000000e+00> : vector<16x32xf32>
    %65 = tpu.matmul %63, %64, %cst_24 {dimension_numbers = #tpu.dot_dimension_numbers<[1], [0], [0], [1], [0, 0, 1, 1], [], []>} : vector<16x8xbf16>, vector<8x32xbf16>, vector<16x32xf32> -> vector<16x32xf32>
    %66 = vector.broadcast %3 : vector<1x32xf32> to vector<16x32xf32>
    %67 = arith.addf %65, %66 : vector<16x32xf32>
    %cst_25 = arith.constant 0.000000e+00 : f32
    %68 = vector.broadcast %cst_25 : f32 to vector<16x32xf32>
    %69 = arith.maximumf %67, %68 : vector<16x32xf32>
    %70 = arith.truncf %69 : vector<16x32xf32> to vector<16x32xbf16>
    %c0_26 = arith.constant 0 : index
    %c0_27 = arith.constant 0 : index
    %71 = vector.load %arg9[%c0_26, %c0_27] : memref<32x16xbf16, #tpu.memory_space<vmem>>, vector<32x16xbf16>
    %cst_28 = arith.constant dense<0.000000e+00> : vector<16x16xf32>
    %72 = tpu.matmul %70, %71, %cst_28 {dimension_numbers = #tpu.dot_dimension_numbers<[1], [0], [0], [1], [0, 0, 1, 1], [], []>} : vector<16x32xbf16>, vector<32x16xbf16>, vector<16x16xf32> -> vector<16x16xf32>
    %73 = arith.truncf %72 : vector<16x16xf32> to vector<16x16xbf16>
    %cst_29 = arith.constant dense<0.000000e+00> : vector<16x16xf32>
    %74 = tpu.matmul %59, %73, %cst_29 {dimension_numbers = #tpu.dot_dimension_numbers<[1], [0], [0], [1], [0, 0, 1, 1], [], []>} : vector<16x16xbf16>, vector<16x16xbf16>, vector<16x16xf32> -> vector<16x16xf32>
    %75 = vector.broadcast %4 : vector<1x16xf32> to vector<16x16xf32>
    %76 = arith.addf %74, %75 : vector<16x16xf32>
    %77 = tpu.iota {dimensions = array<i32: 0>} : vector<2x16xi32>
    %c0_30 = arith.constant 0 : index
    %c0_31 = arith.constant 0 : index
    %78 = vector.load %arg4[%c0_30, %c0_31] : memref<1x16xi32, #tpu.memory_space<vmem>>, vector<1x16xi32>
    %79 = vector.broadcast %78 : vector<1x16xi32> to vector<2x16xi32>
    %80 = arith.cmpi eq, %77, %79 : vector<2x16xi32>
    %81 = arith.extui %80 : vector<2x16xi1> to vector<2x16xi32>
    %82 = arith.sitofp %81 : vector<2x16xi32> to vector<2x16xf32>
    %cst_32 = arith.constant dense<0.000000e+00> : vector<2xf32>
    %83 = vector.multi_reduction <add>, %82, %cst_32 [1] : vector<2x16xf32> to vector<2xf32>
    %84 = vector.shape_cast %83 : vector<2xf32> to vector<2x1xf32>
    %cst_33 = arith.constant 1.000000e+00 : f32
    %85 = vector.broadcast %cst_33 : f32 to vector<2x1xf32>
    %86 = arith.maximumf %84, %85 : vector<2x1xf32>
    %87 = vector.broadcast %86 : vector<2x1xf32> to vector<2x16xf32>
    %88 = arith.divf %82, %87 : vector<2x16xf32>
    %89 = arith.truncf %88 : vector<2x16xf32> to vector<2x16xbf16>
    %90 = arith.truncf %76 : vector<16x16xf32> to vector<16x16xbf16>
    %cst_34 = arith.constant dense<0.000000e+00> : vector<2x16xf32>
    %91 = tpu.matmul %89, %90, %cst_34 {dimension_numbers = #tpu.dot_dimension_numbers<[1], [0], [0], [1], [0, 0, 1, 1], [], []>} : vector<2x16xbf16>, vector<16x16xbf16>, vector<2x16xf32> -> vector<2x16xf32>
    %c0_35 = arith.constant 0 : index
    %c0_36 = arith.constant 0 : index
    %92 = vector.load %arg5[%c0_35, %c0_36] : memref<2x12xf32, #tpu.memory_space<vmem>>, vector<2x12xf32>
    %93 = arith.truncf %92 : vector<2x12xf32> to vector<2x12xbf16>
    %94 = arith.truncf %41 : vector<12x16xf32> to vector<12x16xbf16>
    %cst_37 = arith.constant dense<0.000000e+00> : vector<2x16xf32>
    %95 = tpu.matmul %93, %94, %cst_37 {dimension_numbers = #tpu.dot_dimension_numbers<[1], [0], [0], [1], [0, 0, 1, 1], [], []>} : vector<2x12xbf16>, vector<12x16xbf16>, vector<2x16xf32> -> vector<2x16xf32>
    %96 = arith.truncf %95 : vector<2x16xf32> to vector<2x16xbf16>
    %c0_38 = arith.constant 0 : index
    %c0_39 = arith.constant 0 : index
    %c0_40 = arith.constant 0 : index
    %97 = vector.load %arg10[%c0_38, %c0_39, %c0_40] : memref<2x16x8xbf16, #tpu.memory_space<vmem>>, vector<1x16x8xbf16>
    %98 = vector.shape_cast %97 : vector<1x16x8xbf16> to vector<16x8xbf16>
    %cst_41 = arith.constant dense<0.000000e+00> : vector<2x8xf32>
    %99 = tpu.matmul %96, %98, %cst_41 {dimension_numbers = #tpu.dot_dimension_numbers<[1], [0], [0], [1], [0, 0, 1, 1], [], []>} : vector<2x16xbf16>, vector<16x8xbf16>, vector<2x8xf32> -> vector<2x8xf32>
    %100 = arith.truncf %91 : vector<2x16xf32> to vector<2x16xbf16>
    %c1 = arith.constant 1 : index
    %c0_42 = arith.constant 0 : index
    %c0_43 = arith.constant 0 : index
    %101 = vector.load %arg10[%c1, %c0_42, %c0_43] : memref<2x16x8xbf16, #tpu.memory_space<vmem>>, vector<1x16x8xbf16>
    %102 = vector.shape_cast %101 : vector<1x16x8xbf16> to vector<16x8xbf16>
    %cst_44 = arith.constant dense<0.000000e+00> : vector<2x8xf32>
    %103 = tpu.matmul %100, %102, %cst_44 {dimension_numbers = #tpu.dot_dimension_numbers<[1], [0], [0], [1], [0, 0, 1, 1], [], []>} : vector<2x16xbf16>, vector<16x8xbf16>, vector<2x8xf32> -> vector<2x8xf32>
    %104 = vector.extract_strided_slice %99 {offsets = [0, 0], sizes = [2, 4], strides = [1, 1]} : vector<2x8xf32> to vector<2x4xf32>
    %105 = vector.broadcast %5 : vector<1x4xf32> to vector<2x4xf32>
    %106 = arith.addf %104, %105 : vector<2x4xf32>
    %107 = vector.extract_strided_slice %103 {offsets = [0, 0], sizes = [2, 4], strides = [1, 1]} : vector<2x8xf32> to vector<2x4xf32>
    %108 = vector.broadcast %5 : vector<1x4xf32> to vector<2x4xf32>
    %109 = arith.addf %107, %108 : vector<2x4xf32>
    %110 = vector.extract_strided_slice %99 {offsets = [0, 4], sizes = [2, 4], strides = [1, 1]} : vector<2x8xf32> to vector<2x4xf32>
    %111 = vector.extract_strided_slice %103 {offsets = [0, 4], sizes = [2, 4], strides = [1, 1]} : vector<2x8xf32> to vector<2x4xf32>
    %112 = arith.addf %110, %111 : vector<2x4xf32>
    %113 = vector.broadcast %6 : vector<1x4xf32> to vector<2x4xf32>
    %114 = arith.addf %112, %113 : vector<2x4xf32>
    %115 = tpu.concatenate %106, %109, %114 in 0 : vector<2x4xf32>, vector<2x4xf32>, vector<2x4xf32> -> vector<6x4xf32>
    %cst_45 = arith.constant dense<0xFF800000> : vector<6xf32>
    %116 = vector.multi_reduction <maximumf>, %115, %cst_45 [1] : vector<6x4xf32> to vector<6xf32>
    %117 = vector.shape_cast %116 : vector<6xf32> to vector<6x1xf32>
    %118 = vector.broadcast %117 : vector<6x1xf32> to vector<6x4xf32>
    %119 = arith.subf %115, %118 : vector<6x4xf32>
    %120 = math.exp %119 : vector<6x4xf32>
    %cst_46 = arith.constant dense<0.000000e+00> : vector<6xf32>
    %121 = vector.multi_reduction <add>, %120, %cst_46 [1] : vector<6x4xf32> to vector<6xf32>
    %122 = vector.shape_cast %121 : vector<6xf32> to vector<6x1xf32>
    %123 = math.log %122 : vector<6x1xf32>
    %124 = vector.broadcast %123 : vector<6x1xf32> to vector<6x4xf32>
    %125 = arith.subf %119, %124 : vector<6x4xf32>
    %c0_47 = arith.constant 0 : index
    %c0_48 = arith.constant 0 : index
    %126 = vector.load %arg12[%c0_47, %c0_48] : memref<6x4xf32, #tpu.memory_space<vmem>>, vector<6x4xf32>
    tpu.vector_store %arg12[%c0_47, %c0_48], %125 {strides = array<i32>} : memref<6x4xf32, #tpu.memory_space<vmem>>, vector<6x4xf32>,
    return
  }
}

</mosaic_0001>

<llo_original>
// kernel: forward.1
$region0: #{forward.1}
  #allocation0 [shape = 'u32[]', space=smem, size = 0x4, offset = 0x4, fixed_abs, tag = 'smem constant byte address 0x4 - core index']
  #allocation1 [shape = 'u32[144,128]{1,0:T(1,128)}', space=vmem, size = 0x12000, scoped, tag = 'internal scratch']
  %s0 = inlined_call_operand.vmem [shape: f32[12,12], index: 0, kind: input, shape index: {}]
  %s1 = inlined_call_operand.vmem [shape: f32[12,10], index: 1, kind: input, shape index: {}]
  %s2 = inlined_call_operand.vmem [shape: f32[16,16], index: 2, kind: input, shape index: {}]
  %s3 = inlined_call_operand.vmem [shape: f32[16,8], index: 3, kind: input, shape index: {}]
  %s4 = inlined_call_operand.vmem [shape: s32[1,16], index: 4, kind: input, shape index: {}]
  %s5 = inlined_call_operand.vmem [shape: f32[2,12], index: 5, kind: input, shape index: {}]
  %s6 = inlined_call_operand.vmem [shape: bf16[10,32], index: 6, kind: input, shape index: {}]
  %s7 = inlined_call_operand.vmem [shape: bf16[32,16], index: 7, kind: input, shape index: {}]
  %s8 = inlined_call_operand.vmem [shape: bf16[8,32], index: 8, kind: input, shape index: {}]
  %s9 = inlined_call_operand.vmem [shape: bf16[32,16], index: 9, kind: input, shape index: {}]
  %s10 = inlined_call_operand.vmem [shape: bf16[2,16,8], index: 10, kind: input, shape index: {}]
  %s11 = inlined_call_operand.vmem [shape: f32[8,128], index: 11, kind: input, shape index: {}]
  %s12 = inlined_call_operand.vmem [shape: f32[6,4], index: 12, kind: output, shape index: {}]
  %s13 = sld [smem:[#allocation0]]
  $region58: #{forward.1} parent=0
    _
  %s15 = ssub.s32 1, %s13
  %s16 = scalar_select 0, %s15, %s13
  // Predicated region
  $region2: #{forward.1} parent=0 // pred_check
    _
  $region3: #{forward.1} parent=0 // pred_check_branch
    %18 = sbr.rel (0) target = $region5
  $region4: #{forward.1} parent=0 // pred_region
    _
  $region5: #{forward.1} parent=0 // pred_fallthru
    _
  // Predicated region
  $region6: #{forward.1} parent=0 // pred_check
    _
  $region7: #{forward.1} parent=0 // pred_check_branch
    %20 = sbr.rel (0) target = $region9
  $region8: #{forward.1} parent=0 // pred_region
    _
  $region9: #{forward.1} parent=0 // pred_fallthru
    _
  // Predicated region
  $region10: #{forward.1} parent=0 // pred_check
    _
  $region11: #{forward.1} parent=0 // pred_check_branch
    %22 = sbr.rel (0) target = $region13
  $region12: #{forward.1} parent=0 // pred_region
    _
  $region13: #{forward.1} parent=0 // pred_fallthru
    _
  // Predicated region
  $region14: #{forward.1} parent=0 // pred_check
    _
  $region15: #{forward.1} parent=0 // pred_check_branch
    %24 = sbr.rel (0) target = $region17
  $region16: #{forward.1} parent=0 // pred_region
    _
  $region17: #{forward.1} parent=0 // pred_fallthru
    _
  // Predicated region
  $region18: #{forward.1} parent=0 // pred_check
    _
  $region19: #{forward.1} parent=0 // pred_check_branch
    %26 = sbr.rel (0) target = $region21
  $region20: #{forward.1} parent=0 // pred_region
    _
  $region21: #{forward.1} parent=0 // pred_fallthru
    _
  // Predicated region
  $region22: #{forward.1} parent=0 // pred_check
    _
  $region23: #{forward.1} parent=0 // pred_check_branch
    %28 = sbr.rel (0) target = $region25
  $region24: #{forward.1} parent=0 // pred_region
    _
  $region25: #{forward.1} parent=0 // pred_fallthru
    _
  // Predicated region
  $region26: #{forward.1} parent=0 // pred_check
    _
  $region27: #{forward.1} parent=0 // pred_check_branch
    %30 = sbr.rel (0) target = $region29
  $region28: #{forward.1} parent=0 // pred_region
    _
  $region29: #{forward.1} parent=0 // pred_fallthru
    _
  // Predicated region
  $region30: #{forward.1} parent=0 // pred_check
    _
  $region31: #{forward.1} parent=0 // pred_check_branch
    %32 = sbr.rel (0) target = $region33
  $region32: #{forward.1} parent=0 // pred_region
    _
  $region33: #{forward.1} parent=0 // pred_fallthru
    _
  // Predicated region
  $region34: #{forward.1} parent=0 // pred_check
    _
  $region35: #{forward.1} parent=0 // pred_check_branch
    %34 = sbr.rel (0) target = $region37
  $region36: #{forward.1} parent=0 // pred_region
    _
  $region37: #{forward.1} parent=0 // pred_fallthru
    _
  // Predicated region
  $region38: #{forward.1} parent=0 // pred_check
    _
  $region39: #{forward.1} parent=0 // pred_check_branch
    %36 = sbr.rel (0) target = $region41
  $region40: #{forward.1} parent=0 // pred_region
    _
  $region41: #{forward.1} parent=0 // pred_fallthru
    _
  // Predicated region
  $region42: #{forward.1} parent=0 // pred_check
    _
  $region43: #{forward.1} parent=0 // pred_check_branch
    %38 = sbr.rel (0) target = $region45
  $region44: #{forward.1} parent=0 // pred_region
    _
  $region45: #{forward.1} parent=0 // pred_fallthru
    _
  // Predicated region
  $region46: #{forward.1} parent=0 // pred_check
    _
  $region47: #{forward.1} parent=0 // pred_check_branch
    %40 = sbr.rel (0) target = $region49
  $region48: #{forward.1} parent=0 // pred_region
    _
  $region49: #{forward.1} parent=0 // pred_fallthru
    _
  %v42 = vld [vmem:[%s11] sm:$0xff]
  %v43 = vlaneseq
  %v44 = vshrl.u32 %v43, 7
  %v45 = vadd.s32 %v44, 8
  %v46 = vlaneseq
  %v47 = vand.u32 %v46, 127
  %v48 = vld [vmem:[%s0] sm:$0xff]
  %v49 = vld [vmem:[%s0 + $0x8] sm:$0xf]
  %vm50 = vcmp.eq.s32.totalorder %v44, %v47
  %vm51 = vcmp.eq.s32.totalorder %v45, %v47
  %v52 = vsel %vm50, 1, 0
  %v53 = vsel %vm51, 1, 0
  %v54 = vcvt.s32.f32 %v52
  %v55 = vcvt.s32.f32 %v53
  %v56 = vadd.f32 %v48, %v54
  %v57 = vadd.f32 %v49, %v55
  %vm58 = vcmask 97280
  %v59 = vsel %vm58, %v56, 0.0
  %60 = vadd.xlane.f32.xlu0 %v59
  %v61 = vpop.xlane.xlu0 %60
  %vm62 = vcmask 93184
  %v63 = vsel %vm62, %v57, 0.0
  %64 = vadd.xlane.f32.xlu0 %v63
  %v65 = vpop.xlane.xlu0 %64
  %v66 = vrsqrt.pop %v61
  %v67 = vrsqrt.pop %v65
  %v68 = vadd.f32 %v59, %v63
  %v69 = vrot.slane %v68, 4
  %v70 = vadd.f32 %v68, %v69
  %v71 = vrot.slane %v70, 2
  %v72 = vadd.f32 %v70, %v71
  %v73 = vrot.slane %v72, 1
  %v74 = vadd.f32 %v72, %v73
  %v75 = vrsqrt.pop %v74
  %v76 = vmul.f32 %v56, %v66
  %v77 = vmul.f32 %v57, %v67
  %v78 = vmul.f32 %v76, %v75
  %v79 = vmul.f32 %v77, %v75
  %v80 = vpack.c.bf16 %v79, %v78
  %v81 = vld [vmem:[%s1] sm:$0xff]
  %v82 = vld [vmem:[%s1 + $0x8] sm:$0xf]
  %v83 = vpack.c.bf16 %v82, %v81
  %v85 = vsel %vm58, %v80, 0
  %vm87 = vcmask 1045504
  %v89 = vsel %vm87, %v83, 0
  %91 = vmatprep.subr.bf16.mxu0 0
  %92 = vmatpush1.bf16.msra.mxu0 %v89
  %93 = vmatprep.subr.bf16.mxu0 0
  %94 = vmatpush1.bf16.msra.mxu0 0
  %95 = vmatprep.subr.bf16.mxu0 0
  %96 = vmatpush1.bf16.msra.mxu0 0
  %97 = vmatprep.subr.bf16.mxu0 0
  %98 = vmatpush1.bf16.msra.mxu0 0
  %99 = vmatprep.subr.bf16.mxu0 0
  %100 = vmatpush1.bf16.msra.mxu0 0
  %101 = vmatprep.subr.bf16.mxu0 0
  %102 = vmatpush1.bf16.msra.mxu0 0
  %103 = vmatprep.subr.bf16.mxu0 0
  %104 = vmatpush1.bf16.msra.mxu0 0
  %105 = vmatprep.subr.bf16.mxu0 0
  %106 = vmatpush1.bf16.msra.mxu0 0
  %107 = vmatprep.subr.bf16.mxu0 0
  %108 = vmatpush1.bf16.msra.mxu0 0
  %109 = vmatprep.subr.bf16.mxu0 0
  %110 = vmatpush1.bf16.msra.mxu0 0
  %111 = vmatprep.subr.bf16.mxu0 0
  %112 = vmatpush1.bf16.msra.mxu0 0
  %113 = vmatprep.subr.bf16.mxu0 0
  %114 = vmatpush1.bf16.msra.mxu0 0
  %115 = vmatprep.subr.bf16.mxu0 0
  %116 = vmatpush1.bf16.msra.mxu0 0
  %117 = vmatprep.subr.bf16.mxu0 0
  %118 = vmatpush1.bf16.msra.mxu0 0
  %119 = vmatprep.subr.bf16.mxu0 0
  %120 = vmatpush1.bf16.msra.mxu0 0
  %121 = vmatprep.subr.bf16.mxu0 0
  %122 = vmatpush1.bf16.msra.mxu0 0
  %123 = vmatprep.mubr.bf16.mxu0 0
  %124 = vmatmul.mubr.bf16.gmra.mrb[0].mxu0 %v85
  %v125 = vpop.f32.mrb[0].mxu0
  %v126 = vadd.f32 0.0, %v125
  %v127 = vpop.f32.mrb[0].mxu0
  %v128 = vpop.f32.mrb[0].mxu0
  %v129 = vadd.f32 0.0, %v128
  %v130 = vpop.f32.mrb[0].mxu0
  %131 = vdwg.mxu0
  %v132 = vpack.c.bf16 %v129, %v126
  %v133 = vld [vmem:[%s6] sm:$0xf]
  %v134 = vld [vmem:[%s6 + $0x4] sm:$0x1]
  %v135 = vlaneseq
  %v136 = vshrl.u32 %v135, 7
  %v137 = vsub.s32 0, %v136
  %v138 = vrot.slane %v42, %v137
  %v141 = vunpack.c.l.b16 %v133
  %v142 = vunpack.c.l.b16 %v134
  %v143 = vpack.c.b16 %v142, %v141
  %vm144 = vcmask 80896
  %v146 = vsel %vm144, %v132, 0
  %vm148 = vcmask 1044480
  %v150 = vsel %vm148, %v143, 0
  %152 = vmatprep.subr.bf16.mxu0 0
  %153 = vmatpush1.bf16.msra.mxu0 %v150
  %154 = vmatprep.subr.bf16.mxu0 0
  %155 = vmatpush1.bf16.msra.mxu0 0
  %156 = vmatprep.subr.bf16.mxu0 0
  %157 = vmatpush1.bf16.msra.mxu0 0
  %158 = vmatprep.subr.bf16.mxu0 0
  %159 = vmatpush1.bf16.msra.mxu0 0
  %160 = vmatprep.subr.bf16.mxu0 0
  %161 = vmatpush1.bf16.msra.mxu0 0
  %162 = vmatprep.subr.bf16.mxu0 0
  %163 = vmatpush1.bf16.msra.mxu0 0
  %164 = vmatprep.subr.bf16.mxu0 0
  %165 = vmatpush1.bf16.msra.mxu0 0
  %166 = vmatprep.subr.bf16.mxu0 0
  %167 = vmatpush1.bf16.msra.mxu0 0
  %168 = vmatprep.subr.bf16.mxu0 0
  %169 = vmatpush1.bf16.msra.mxu0 0
  %170 = vmatprep.subr.bf16.mxu0 0
  %171 = vmatpush1.bf16.msra.mxu0 0
  %172 = vmatprep.subr.bf16.mxu0 0
  %173 = vmatpush1.bf16.msra.mxu0 0
  %174 = vmatprep.subr.bf16.mxu0 0
  %175 = vmatpush1.bf16.msra.mxu0 0
  %176 = vmatprep.subr.bf16.mxu0 0
  %177 = vmatpush1.bf16.msra.mxu0 0
  %178 = vmatprep.subr.bf16.mxu0 0
  %179 = vmatpush1.bf16.msra.mxu0 0
  %180 = vmatprep.subr.bf16.mxu0 0
  %181 = vmatpush1.bf16.msra.mxu0 0
  %182 = vmatprep.subr.bf16.mxu0 0
  %183 = vmatpush1.bf16.msra.mxu0 0
  %184 = vmatprep.mubr.bf16.mxu0 0
  %185 = vmatmul.mubr.bf16.gmra.mrb[0].mxu0 %v146
  %v186 = vpop.f32.mrb[0].mxu0
  %v187 = vadd.f32 %v138, %v186
  %v188 = vpop.f32.mrb[0].mxu0
  %v189 = vpop.f32.mrb[0].mxu0
  %v190 = vadd.f32 %v138, %v189
  %v191 = vpop.f32.mrb[0].mxu0
  %192 = vdwg.mxu0
  %v193 = vmax.f32 %v187, 0.0
  %v194 = vmax.f32 %v190, 0.0
  %v195 = vpack.c.bf16 %v194, %v193
  %v196 = vld [vmem:[%s7] sm:$0xf]
  %v197 = vld [vmem:[%s7 + $0x4] sm:$0xf]
  %v198 = vld [vmem:[%s7 + $0x8] sm:$0xf]
  %v199 = vld [vmem:[%s7 + $0xc] sm:$0xf]
  %v204 = vunpack.c.l.b16 %v196
  %v205 = vunpack.c.l.b16 %v197
  %v206 = vunpack.c.l.b16 %v198
  %v207 = vunpack.c.l.b16 %v199
  %v208 = vpack.c.b16 %v205, %v204
  %v209 = vpack.c.b16 %v207, %v206
  %vm212 = vcmask 261120
  %v214 = vsel %vm212, %v195, 0
  %216 = vmatprep.subr.bf16.mxu0 0
  %217 = vmatpush1.bf16.msra.mxu0 %v208
  %218 = vmatprep.subr.bf16.mxu0 0
  %219 = vmatpush1.bf16.msra.mxu0 %v209
  %220 = vmatprep.subr.bf16.mxu0 0
  %221 = vmatpush1.bf16.msra.mxu0 0
  %222 = vmatprep.subr.bf16.mxu0 0
  %223 = vmatpush1.bf16.msra.mxu0 0
  %224 = vmatprep.subr.bf16.mxu0 0
  %225 = vmatpush1.bf16.msra.mxu0 0
  %226 = vmatprep.subr.bf16.mxu0 0
  %227 = vmatpush1.bf16.msra.mxu0 0
  %228 = vmatprep.subr.bf16.mxu0 0
  %229 = vmatpush1.bf16.msra.mxu0 0
  %230 = vmatprep.subr.bf16.mxu0 0
  %231 = vmatpush1.bf16.msra.mxu0 0
  %232 = vmatprep.subr.bf16.mxu0 0
  %233 = vmatpush1.bf16.msra.mxu0 0
  %234 = vmatprep.subr.bf16.mxu0 0
  %235 = vmatpush1.bf16.msra.mxu0 0
  %236 = vmatprep.subr.bf16.mxu0 0
  %237 = vmatpush1.bf16.msra.mxu0 0
  %238 = vmatprep.subr.bf16.mxu0 0
  %239 = vmatpush1.bf16.msra.mxu0 0
  %240 = vmatprep.subr.bf16.mxu0 0
  %241 = vmatpush1.bf16.msra.mxu0 0
  %242 = vmatprep.subr.bf16.mxu0 0
  %243 = vmatpush1.bf16.msra.mxu0 0
  %244 = vmatprep.subr.bf16.mxu0 0
  %245 = vmatpush1.bf16.msra.mxu0 0
  %246 = vmatprep.subr.bf16.mxu0 0
  %247 = vmatpush1.bf16.msra.mxu0 0
  %248 = vmatprep.mubr.bf16.mxu0 0
  %249 = vmatmul.mubr.bf16.gmra.mrb[0].mxu0 %v214
  %v250 = vpop.f32.mrb[0].mxu0
  %v251 = vadd.f32 0.0, %v250
  %v252 = vpop.f32.mrb[0].mxu0
  %v253 = vpop.f32.mrb[0].mxu0
  %v254 = vadd.f32 0.0, %v253
  %v255 = vpop.f32.mrb[0].mxu0
  %256 = vdwg.mxu0
  %v257 = vpack.c.bf16 %v254, %v251
  %v258 = vlaneseq
  %v259 = vshrl.u32 %v258, 7
  %v260 = vsub.s32 1, %v259
  %v261 = vrot.slane %v42, %v260
  %v263 = vsel %vm87, %v257, 0
  %265 = vmatprep.subr.bf16.mxu0 0
  %266 = vmatpush1.bf16.msra.mxu0 %v263
  %267 = vmatprep.subr.bf16.mxu0 0
  %268 = vmatpush1.bf16.msra.mxu0 0
  %269 = vmatprep.subr.bf16.mxu0 0
  %270 = vmatpush1.bf16.msra.mxu0 0
  %271 = vmatprep.subr.bf16.mxu0 0
  %272 = vmatpush1.bf16.msra.mxu0 0
  %273 = vmatprep.subr.bf16.mxu0 0
  %274 = vmatpush1.bf16.msra.mxu0 0
  %275 = vmatprep.subr.bf16.mxu0 0
  %276 = vmatpush1.bf16.msra.mxu0 0
  %277 = vmatprep.subr.bf16.mxu0 0
  %278 = vmatpush1.bf16.msra.mxu0 0
  %279 = vmatprep.subr.bf16.mxu0 0
  %280 = vmatpush1.bf16.msra.mxu0 0
  %281 = vmatprep.subr.bf16.mxu0 0
  %282 = vmatpush1.bf16.msra.mxu0 0
  %283 = vmatprep.subr.bf16.mxu0 0
  %284 = vmatpush1.bf16.msra.mxu0 0
  %285 = vmatprep.subr.bf16.mxu0 0
  %286 = vmatpush1.bf16.msra.mxu0 0
  %287 = vmatprep.subr.bf16.mxu0 0
  %288 = vmatpush1.bf16.msra.mxu0 0
  %289 = vmatprep.subr.bf16.mxu0 0
  %290 = vmatpush1.bf16.msra.mxu0 0
  %291 = vmatprep.subr.bf16.mxu0 0
  %292 = vmatpush1.bf16.msra.mxu0 0
  %293 = vmatprep.subr.bf16.mxu0 0
  %294 = vmatpush1.bf16.msra.mxu0 0
  %295 = vmatprep.subr.bf16.mxu0 0
  %296 = vmatpush1.bf16.msra.mxu0 0
  %297 = vmatprep.mubr.bf16.mxu0 0
  %298 = vmatmul.mubr.bf16.gmra.mrb[0].mxu0 %v85
  %v299 = vpop.f32.mrb[0].mxu0
  %v300 = vadd.f32 %v261, %v299
  %v301 = vpop.f32.mrb[0].mxu0
  %v302 = vpop.f32.mrb[0].mxu0
  %v303 = vadd.f32 %v261, %v302
  %v304 = vpop.f32.mrb[0].mxu0
  %305 = vdwg.mxu0
  %v306 = vld [vmem:[%s2] sm:$0xff]
  %v307 = vld [vmem:[%s2 + $0x8] sm:$0xff]
  %v308 = vadd.f32 %v306, %v54
  %v309 = vadd.f32 %v307, %v55
  %vm310 = vcmask 130048
  %v311 = vsel %vm310, %v308, 0.0
  %312 = vadd.xlane.f32.xlu0 %v311
  %v313 = vpop.xlane.xlu0 %312
  %v314 = vsel %vm310, %v309, 0.0
  %315 = vadd.xlane.f32.xlu0 %v314
  %v316 = vpop.xlane.xlu0 %315
  %v317 = vrsqrt.pop %v313
  %v318 = vrsqrt.pop %v316
  %v319 = vadd.f32 %v311, %v314
  %v320 = vrot.slane %v319, 4
  %v321 = vadd.f32 %v319, %v320
  %v322 = vrot.slane %v321, 2
  %v323 = vadd.f32 %v321, %v322
  %v324 = vrot.slane %v323, 1
  %v325 = vadd.f32 %v323, %v324
  %v326 = vrsqrt.pop %v325
  %v327 = vmul.f32 %v308, %v317
  %v328 = vmul.f32 %v309, %v318
  %v329 = vmul.f32 %v327, %v326
  %v330 = vmul.f32 %v328, %v326
  %v331 = vpack.c.bf16 %v330, %v329
  %v332 = vld [vmem:[%s3] sm:$0xff]
  %v333 = vld [vmem:[%s3 + $0x8] sm:$0xff]
  %v334 = vpack.c.bf16 %v333, %v332
  %v336 = vsel %vm310, %v331, 0
  %338 = vmatprep.subr.bf16.mxu0 0
  %339 = vmatpush1.bf16.msra.mxu0 %v334
  %340 = vmatprep.subr.bf16.mxu0 0
  %341 = vmatpush1.bf16.msra.mxu0 0
  %342 = vmatprep.subr.bf16.mxu0 0
  %343 = vmatpush1.bf16.msra.mxu0 0
  %344 = vmatprep.subr.bf16.mxu0 0
  %345 = vmatpush1.bf16.msra.mxu0 0
  %346 = vmatprep.subr.bf16.mxu0 0
  %347 = vmatpush1.bf16.msra.mxu0 0
  %348 = vmatprep.subr.bf16.mxu0 0
  %349 = vmatpush1.bf16.msra.mxu0 0
  %350 = vmatprep.subr.bf16.mxu0 0
  %351 = vmatpush1.bf16.msra.mxu0 0
  %352 = vmatprep.subr.bf16.mxu0 0
  %353 = vmatpush1.bf16.msra.mxu0 0
  %354 = vmatprep.subr.bf16.mxu0 0
  %355 = vmatpush1.bf16.msra.mxu0 0
  %356 = vmatprep.subr.bf16.mxu0 0
  %357 = vmatpush1.bf16.msra.mxu0 0
  %358 = vmatprep.subr.bf16.mxu0 0
  %359 = vmatpush1.bf16.msra.mxu0 0
  %360 = vmatprep.subr.bf16.mxu0 0
  %361 = vmatpush1.bf16.msra.mxu0 0
  %362 = vmatprep.subr.bf16.mxu0 0
  %363 = vmatpush1.bf16.msra.mxu0 0
  %364 = vmatprep.subr.bf16.mxu0 0
  %365 = vmatpush1.bf16.msra.mxu0 0
  %366 = vmatprep.subr.bf16.mxu0 0
  %367 = vmatpush1.bf16.msra.mxu0 0
  %368 = vmatprep.subr.bf16.mxu0 0
  %369 = vmatpush1.bf16.msra.mxu0 0
  %370 = vmatprep.mubr.bf16.mxu0 0
  %371 = vmatmul.mubr.bf16.gmra.mrb[0].mxu0 %v336
  %v372 = vpop.f32.mrb[0].mxu0
  %v373 = vadd.f32 0.0, %v372
  %v374 = vpop.f32.mrb[0].mxu0
  %v375 = vpop.f32.mrb[0].mxu0
  %v376 = vadd.f32 0.0, %v375
  %v377 = vpop.f32.mrb[0].mxu0
  %378 = vdwg.mxu0
  %v379 = vpack.c.bf16 %v376, %v373
  %v380 = vld [vmem:[%s8] sm:$0xf]
  %v381 = vlaneseq
  %v382 = vshrl.u32 %v381, 7
  %v383 = vsub.s32 2, %v382
  %v384 = vrot.slane %v42, %v383
  %vm385 = vcmask 64512
  %v387 = vsel %vm385, %v379, 0
  %vm389 = vcmask 1043456
  %v391 = vsel %vm389, %v380, 0
  %393 = vmatprep.subr.bf16.mxu0 0
  %394 = vmatpush1.bf16.msra.mxu0 %v391
  %395 = vmatprep.subr.bf16.mxu0 0
  %396 = vmatpush1.bf16.msra.mxu0 0
  %397 = vmatprep.subr.bf16.mxu0 0
  %398 = vmatpush1.bf16.msra.mxu0 0
  %399 = vmatprep.subr.bf16.mxu0 0
  %400 = vmatpush1.bf16.msra.mxu0 0
  %401 = vmatprep.subr.bf16.mxu0 0
  %402 = vmatpush1.bf16.msra.mxu0 0
  %403 = vmatprep.subr.bf16.mxu0 0
  %404 = vmatpush1.bf16.msra.mxu0 0
  %405 = vmatprep.subr.bf16.mxu0 0
  %406 = vmatpush1.bf16.msra.mxu0 0
  %407 = vmatprep.subr.bf16.mxu0 0
  %408 = vmatpush1.bf16.msra.mxu0 0
  %409 = vmatprep.subr.bf16.mxu0 0
  %410 = vmatpush1.bf16.msra.mxu0 0
  %411 = vmatprep.subr.bf16.mxu0 0
  %412 = vmatpush1.bf16.msra.mxu0 0
  %413 = vmatprep.subr.bf16.mxu0 0
  %414 = vmatpush1.bf16.msra.mxu0 0
  %415 = vmatprep.subr.bf16.mxu0 0
  %416 = vmatpush1.bf16.msra.mxu0 0
  %417 = vmatprep.subr.bf16.mxu0 0
  %418 = vmatpush1.bf16.msra.mxu0 0
  %419 = vmatprep.subr.bf16.mxu0 0
  %420 = vmatpush1.bf16.msra.mxu0 0
  %421 = vmatprep.subr.bf16.mxu0 0
  %422 = vmatpush1.bf16.msra.mxu0 0
  %423 = vmatprep.subr.bf16.mxu0 0
  %424 = vmatpush1.bf16.msra.mxu0 0
  %425 = vmatprep.mubr.bf16.mxu0 0
  %426 = vmatmul.mubr.bf16.gmra.mrb[0].mxu0 %v387
  %v427 = vpop.f32.mrb[0].mxu0
  %v428 = vadd.f32 %v384, %v427
  %v429 = vpop.f32.mrb[0].mxu0
  %v430 = vpop.f32.mrb[0].mxu0
  %v431 = vadd.f32 %v384, %v430
  %v432 = vpop.f32.mrb[0].mxu0
  %433 = vdwg.mxu0
  %v434 = vmax.f32 %v428, 0.0
  %v435 = vmax.f32 %v431, 0.0
  %v436 = vpack.c.bf16 %v435, %v434
  %v437 = vld [vmem:[%s9] sm:$0xf]
  %v438 = vld [vmem:[%s9 + $0x4] sm:$0xf]
  %v439 = vld [vmem:[%s9 + $0x8] sm:$0xf]
  %v440 = vld [vmem:[%s9 + $0xc] sm:$0xf]
  %v445 = vunpack.c.l.b16 %v437
  %v446 = vunpack.c.l.b16 %v438
  %v447 = vunpack.c.l.b16 %v439
  %v448 = vunpack.c.l.b16 %v440
  %v449 = vpack.c.b16 %v446, %v445
  %v450 = vpack.c.b16 %v448, %v447
  %v454 = vsel %vm212, %v436, 0
  %456 = vmatprep.subr.bf16.mxu0 0
  %457 = vmatpush1.bf16.msra.mxu0 %v449
  %458 = vmatprep.subr.bf16.mxu0 0
  %459 = vmatpush1.bf16.msra.mxu0 %v450
  %460 = vmatprep.subr.bf16.mxu0 0
  %461 = vmatpush1.bf16.msra.mxu0 0
  %462 = vmatprep.subr.bf16.mxu0 0
  %463 = vmatpush1.bf16.msra.mxu0 0
  %464 = vmatprep.subr.bf16.mxu0 0
  %465 = vmatpush1.bf16.msra.mxu0 0
  %466 = vmatprep.subr.bf16.mxu0 0
  %467 = vmatpush1.bf16.msra.mxu0 0
  %468 = vmatprep.subr.bf16.mxu0 0
  %469 = vmatpush1.bf16.msra.mxu0 0
  %470 = vmatprep.subr.bf16.mxu0 0
  %471 = vmatpush1.bf16.msra.mxu0 0
  %472 = vmatprep.subr.bf16.mxu0 0
  %473 = vmatpush1.bf16.msra.mxu0 0
  %474 = vmatprep.subr.bf16.mxu0 0
  %475 = vmatpush1.bf16.msra.mxu0 0
  %476 = vmatprep.subr.bf16.mxu0 0
  %477 = vmatpush1.bf16.msra.mxu0 0
  %478 = vmatprep.subr.bf16.mxu0 0
  %479 = vmatpush1.bf16.msra.mxu0 0
  %480 = vmatprep.subr.bf16.mxu0 0
  %481 = vmatpush1.bf16.msra.mxu0 0
  %482 = vmatprep.subr.bf16.mxu0 0
  %483 = vmatpush1.bf16.msra.mxu0 0
  %484 = vmatprep.subr.bf16.mxu0 0
  %485 = vmatpush1.bf16.msra.mxu0 0
  %486 = vmatprep.subr.bf16.mxu0 0
  %487 = vmatpush1.bf16.msra.mxu0 0
  %488 = vmatprep.mubr.bf16.mxu0 0
  %489 = vmatmul.mubr.bf16.gmra.mrb[0].mxu0 %v454
  %v490 = vpop.f32.mrb[0].mxu0
  %v491 = vadd.f32 0.0, %v490
  %v492 = vpop.f32.mrb[0].mxu0
  %v493 = vpop.f32.mrb[0].mxu0
  %v494 = vadd.f32 0.0, %v493
  %v495 = vpop.f32.mrb[0].mxu0
  %496 = vdwg.mxu0
  %v497 = vpack.c.bf16 %v494, %v491
  %v498 = vlaneseq
  %v499 = vshrl.u32 %v498, 7
  %v500 = vsub.s32 3, %v499
  %v501 = vrot.slane %v42, %v500
  %502 = vmatprep.subr.bf16.mxu0 0
  %503 = vmatpush1.bf16.msra.mxu0 %v497
  %504 = vmatprep.subr.bf16.mxu0 0
  %505 = vmatpush1.bf16.msra.mxu0 0
  %506 = vmatprep.subr.bf16.mxu0 0
  %507 = vmatpush1.bf16.msra.mxu0 0
  %508 = vmatprep.subr.bf16.mxu0 0
  %509 = vmatpush1.bf16.msra.mxu0 0
  %510 = vmatprep.subr.bf16.mxu0 0
  %511 = vmatpush1.bf16.msra.mxu0 0
  %512 = vmatprep.subr.bf16.mxu0 0
  %513 = vmatpush1.bf16.msra.mxu0 0
  %514 = vmatprep.subr.bf16.mxu0 0
  %515 = vmatpush1.bf16.msra.mxu0 0
  %516 = vmatprep.subr.bf16.mxu0 0
  %517 = vmatpush1.bf16.msra.mxu0 0
  %518 = vmatprep.subr.bf16.mxu0 0
  %519 = vmatpush1.bf16.msra.mxu0 0
  %520 = vmatprep.subr.bf16.mxu0 0
  %521 = vmatpush1.bf16.msra.mxu0 0
  %522 = vmatprep.subr.bf16.mxu0 0
  %523 = vmatpush1.bf16.msra.mxu0 0
  %524 = vmatprep.subr.bf16.mxu0 0
  %525 = vmatpush1.bf16.msra.mxu0 0
  %526 = vmatprep.subr.bf16.mxu0 0
  %527 = vmatpush1.bf16.msra.mxu0 0
  %528 = vmatprep.subr.bf16.mxu0 0
  %529 = vmatpush1.bf16.msra.mxu0 0
  %530 = vmatprep.subr.bf16.mxu0 0
  %531 = vmatpush1.bf16.msra.mxu0 0
  %532 = vmatprep.subr.bf16.mxu0 0
  %533 = vmatpush1.bf16.msra.mxu0 0
  %534 = vmatprep.mubr.bf16.mxu0 0
  %535 = vmatmul.mubr.bf16.gmra.mrb[0].mxu0 %v336
  %v536 = vpop.f32.mrb[0].mxu0
  %v537 = vadd.f32 %v501, %v536
  %v538 = vpop.f32.mrb[0].mxu0
  %v539 = vpop.f32.mrb[0].mxu0
  %v540 = vadd.f32 %v501, %v539
  %v541 = vpop.f32.mrb[0].mxu0
  %542 = vdwg.mxu0
  %v543 = vld [vmem:[%s4] sm:$0x1]
  %v544 = vlaneseq
  %v545 = vshrl.u32 %v544, 7
  %v546 = vsub.s32 0, %v545
  %v547 = vrot.slane %v543, %v546
  %vm548 = vcmp.eq.s32.totalorder %v44, %v547
  %v549 = vsel %vm548, 1, 0
  %v550 = vcvt.s32.f32 %v549
  %vm551 = vcmask 123904
  %v552 = vsel %vm551, %v550, 0.0
  %553 = vadd.xlane.f32.xlu0 %v552
  %v554 = vpop.xlane.xlu0 %553
  %v555 = vmax.f32 %v554, 1.0
  %v556 = vrcp.pop %v555
  %v557 = vmul.f32 %v550, %v556
  %v558 = vpack.c.bf16 %v557, %v557
  %v559 = vpack.c.bf16 %v540, %v537
  %v561 = vsel %vm310, %v558, 0
  %563 = vmatprep.subr.bf16.mxu0 0
  %564 = vmatpush1.bf16.msra.mxu0 %v559
  %565 = vmatprep.subr.bf16.mxu0 0
  %566 = vmatpush1.bf16.msra.mxu0 0
  %567 = vmatprep.subr.bf16.mxu0 0
  %568 = vmatpush1.bf16.msra.mxu0 0
  %569 = vmatprep.subr.bf16.mxu0 0
  %570 = vmatpush1.bf16.msra.mxu0 0
  %571 = vmatprep.subr.bf16.mxu0 0
  %572 = vmatpush1.bf16.msra.mxu0 0
  %573 = vmatprep.subr.bf16.mxu0 0
  %574 = vmatpush1.bf16.msra.mxu0 0
  %575 = vmatprep.subr.bf16.mxu0 0
  %576 = vmatpush1.bf16.msra.mxu0 0
  %577 = vmatprep.subr.bf16.mxu0 0
  %578 = vmatpush1.bf16.msra.mxu0 0
  %579 = vmatprep.subr.bf16.mxu0 0
  %580 = vmatpush1.bf16.msra.mxu0 0
  %581 = vmatprep.subr.bf16.mxu0 0
  %582 = vmatpush1.bf16.msra.mxu0 0
  %583 = vmatprep.subr.bf16.mxu0 0
  %584 = vmatpush1.bf16.msra.mxu0 0
  %585 = vmatprep.subr.bf16.mxu0 0
  %586 = vmatpush1.bf16.msra.mxu0 0
  %587 = vmatprep.subr.bf16.mxu0 0
  %588 = vmatpush1.bf16.msra.mxu0 0
  %589 = vmatprep.subr.bf16.mxu0 0
  %590 = vmatpush1.bf16.msra.mxu0 0
  %591 = vmatprep.subr.bf16.mxu0 0
  %592 = vmatpush1.bf16.msra.mxu0 0
  %593 = vmatprep.subr.bf16.mxu0 0
  %594 = vmatpush1.bf16.msra.mxu0 0
  %595 = vmatprep.mubr.bf16.mxu0 0
  %596 = vmatmul.mubr.bf16.gmra.mrb[0].mxu0 %v561
  %v597 = vpop.f32.mrb[0].mxu0
  %v598 = vadd.f32 0.0, %v597
  %v599 = vpop.f32.mrb[0].mxu0
  %v600 = vpop.f32.mrb[0].mxu0
  %v601 = vpop.f32.mrb[0].mxu0
  %602 = vdwg.mxu0
  %v603 = vld [vmem:[%s5] sm:$0x3]
  %v604 = vpack.c.bf16 %v603, %v603
  %v605 = vpack.c.bf16 %v303, %v300
  %v607 = vsel %vm58, %v604, 0
  %v610 = vsel %vm87, %v605, 0
  %612 = vmatprep.subr.bf16.mxu0 0
  %613 = vmatpush1.bf16.msra.mxu0 %v610
  %614 = vmatprep.subr.bf16.mxu0 0
  %615 = vmatpush1.bf16.msra.mxu0 0
  %616 = vmatprep.subr.bf16.mxu0 0
  %617 = vmatpush1.bf16.msra.mxu0 0
  %618 = vmatprep.subr.bf16.mxu0 0
  %619 = vmatpush1.bf16.msra.mxu0 0
  %620 = vmatprep.subr.bf16.mxu0 0
  %621 = vmatpush1.bf16.msra.mxu0 0
  %622 = vmatprep.subr.bf16.mxu0 0
  %623 = vmatpush1.bf16.msra.mxu0 0
  %624 = vmatprep.subr.bf16.mxu0 0
  %625 = vmatpush1.bf16.msra.mxu0 0
  %626 = vmatprep.subr.bf16.mxu0 0
  %627 = vmatpush1.bf16.msra.mxu0 0
  %628 = vmatprep.subr.bf16.mxu0 0
  %629 = vmatpush1.bf16.msra.mxu0 0
  %630 = vmatprep.subr.bf16.mxu0 0
  %631 = vmatpush1.bf16.msra.mxu0 0
  %632 = vmatprep.subr.bf16.mxu0 0
  %633 = vmatpush1.bf16.msra.mxu0 0
  %634 = vmatprep.subr.bf16.mxu0 0
  %635 = vmatpush1.bf16.msra.mxu0 0
  %636 = vmatprep.subr.bf16.mxu0 0
  %637 = vmatpush1.bf16.msra.mxu0 0
  %638 = vmatprep.subr.bf16.mxu0 0
  %639 = vmatpush1.bf16.msra.mxu0 0
  %640 = vmatprep.subr.bf16.mxu0 0
  %641 = vmatpush1.bf16.msra.mxu0 0
  %642 = vmatprep.subr.bf16.mxu0 0
  %643 = vmatpush1.bf16.msra.mxu0 0
  %644 = vmatprep.mubr.bf16.mxu0 0
  %645 = vmatmul.mubr.bf16.gmra.mrb[0].mxu0 %v607
  %v646 = vpop.f32.mrb[0].mxu0
  %v647 = vadd.f32 0.0, %v646
  %v648 = vpop.f32.mrb[0].mxu0
  %v649 = vpop.f32.mrb[0].mxu0
  %v650 = vpop.f32.mrb[0].mxu0
  %651 = vdwg.mxu0
  %v652 = vpack.c.bf16 %v647, %v647
  %v653 = vld [vmem:[%s10] sm:$0xf]
  %v654 = vld [vmem:[%s10 + $0x4] sm:$0xf]
  %v657 = vunpack.c.l.b16 %v653
  %v658 = vunpack.c.l.b16 %v654
  %v659 = vpack.c.b16 %v658, %v657
  %v662 = vsel %vm310, %v652, 0
  %664 = vmatprep.subr.bf16.mxu0 0
  %665 = vmatpush1.bf16.msra.mxu0 %v659
  %666 = vmatprep.subr.bf16.mxu0 0
  %667 = vmatpush1.bf16.msra.mxu0 0
  %668 = vmatprep.subr.bf16.mxu0 0
  %669 = vmatpush1.bf16.msra.mxu0 0
  %670 = vmatprep.subr.bf16.mxu0 0
  %671 = vmatpush1.bf16.msra.mxu0 0
  %672 = vmatprep.subr.bf16.mxu0 0
  %673 = vmatpush1.bf16.msra.mxu0 0
  %674 = vmatprep.subr.bf16.mxu0 0
  %675 = vmatpush1.bf16.msra.mxu0 0
  %676 = vmatprep.subr.bf16.mxu0 0
  %677 = vmatpush1.bf16.msra.mxu0 0
  %678 = vmatprep.subr.bf16.mxu0 0
  %679 = vmatpush1.bf16.msra.mxu0 0
  %680 = vmatprep.subr.bf16.mxu0 0
  %681 = vmatpush1.bf16.msra.mxu0 0
  %682 = vmatprep.subr.bf16.mxu0 0
  %683 = vmatpush1.bf16.msra.mxu0 0
  %684 = vmatprep.subr.bf16.mxu0 0
  %685 = vmatpush1.bf16.msra.mxu0 0
  %686 = vmatprep.subr.bf16.mxu0 0
  %687 = vmatpush1.bf16.msra.mxu0 0
  %688 = vmatprep.subr.bf16.mxu0 0
  %689 = vmatpush1.bf16.msra.mxu0 0
  %690 = vmatprep.subr.bf16.mxu0 0
  %691 = vmatpush1.bf16.msra.mxu0 0
  %692 = vmatprep.subr.bf16.mxu0 0
  %693 = vmatpush1.bf16.msra.mxu0 0
  %694 = vmatprep.subr.bf16.mxu0 0
  %695 = vmatpush1.bf16.msra.mxu0 0
  %696 = vmatprep.mubr.bf16.mxu0 0
  %697 = vmatmul.mubr.bf16.gmra.mrb[0].mxu0 %v662
  %v698 = vpop.f32.mrb[0].mxu0
  %v699 = vadd.f32 0.0, %v698
  %v700 = vpop.f32.mrb[0].mxu0
  %v701 = vpop.f32.mrb[0].mxu0
  %v702 = vpop.f32.mrb[0].mxu0
  %703 = vdwg.mxu0
  %v704 = vpack.c.bf16 %v598, %v598
  %s705 = scalar_lea.vmem %s10, 8
  %v706 = vld [vmem:[%s705] sm:$0xf]
  %v707 = vld [vmem:[%s705 + $0x4] sm:$0xf]
  %v710 = vunpack.c.l.b16 %v706
  %v711 = vunpack.c.l.b16 %v707
  %v712 = vpack.c.b16 %v711, %v710
  %v715 = vsel %vm310, %v704, 0
  %717 = vmatprep.subr.bf16.mxu0 0
  %718 = vmatpush1.bf16.msra.mxu0 %v712
  %719 = vmatprep.subr.bf16.mxu0 0
  %720 = vmatpush1.bf16.msra.mxu0 0
  %721 = vmatprep.subr.bf16.mxu0 0
  %722 = vmatpush1.bf16.msra.mxu0 0
  %723 = vmatprep.subr.bf16.mxu0 0
  %724 = vmatpush1.bf16.msra.mxu0 0
  %725 = vmatprep.subr.bf16.mxu0 0
  %726 = vmatpush1.bf16.msra.mxu0 0
  %727 = vmatprep.subr.bf16.mxu0 0
  %728 = vmatpush1.bf16.msra.mxu0 0
  %729 = vmatprep.subr.bf16.mxu0 0
  %730 = vmatpush1.bf16.msra.mxu0 0
  %731 = vmatprep.subr.bf16.mxu0 0
  %732 = vmatpush1.bf16.msra.mxu0 0
  %733 = vmatprep.subr.bf16.mxu0 0
  %734 = vmatpush1.bf16.msra.mxu0 0
  %735 = vmatprep.subr.bf16.mxu0 0
  %736 = vmatpush1.bf16.msra.mxu0 0
  %737 = vmatprep.subr.bf16.mxu0 0
  %738 = vmatpush1.bf16.msra.mxu0 0
  %739 = vmatprep.subr.bf16.mxu0 0
  %740 = vmatpush1.bf16.msra.mxu0 0
  %741 = vmatprep.subr.bf16.mxu0 0
  %742 = vmatpush1.bf16.msra.mxu0 0
  %743 = vmatprep.subr.bf16.mxu0 0
  %744 = vmatpush1.bf16.msra.mxu0 0
  %745 = vmatprep.subr.bf16.mxu0 0
  %746 = vmatpush1.bf16.msra.mxu0 0
  %747 = vmatprep.subr.bf16.mxu0 0
  %748 = vmatpush1.bf16.msra.mxu0 0
  %749 = vmatprep.mubr.bf16.mxu0 0
  %750 = vmatmul.mubr.bf16.gmra.mrb[0].mxu0 %v715
  %v751 = vpop.f32.mrb[0].mxu0
  %v752 = vadd.f32 0.0, %v751
  %v753 = vpop.f32.mrb[0].mxu0
  %v754 = vpop.f32.mrb[0].mxu0
  %v755 = vpop.f32.mrb[0].mxu0
  %756 = vdwg.mxu0
  %v757 = vlaneseq
  %v758 = vshrl.u32 %v757, 7
  %v759 = vsub.s32 4, %v758
  %v760 = vrot.slane %v42, %v759
  %v761 = vadd.f32 %v699, %v760
  %v762 = vadd.f32 %v752, %v760
  %v763 = vadd.f32 %v699, %v752
  %v764 = vlaneseq
  %v765 = vshrl.u32 %v764, 7
  %v766 = vsub.s32 5, %v765
  %v767 = vrot.slane %v42, %v766
  %769 = vrot.lane.b32.xlu0 %v767, 4
  %v770 = vpop.permute.xlu0 %769
  %v772 = vadd.f32 %v763, %v770
  %v774 = vrot.slane %v762, 6
  %v777 = vrot.slane %v772, 4
  %778 = vrot.lane.b32.xlu0 %v777, 124
  %v779 = vpop.permute.xlu0 %778
  %vm781 = vcmask 1041408
  %v782 = vsel %vm781, %v761, %v774
  %v783 = vsel %vm389, %v782, %v779
  %vm784 = vcmask 29696
  %v785 = vsel %vm784, %v783, -inf
  %786 = vmax.xlane.f32.xlu0 %v785
  %v787 = vpop.xlane.xlu0 %786
  %v788 = vsub.f32 %v783, %v787
  %v789 = vmul.f32 %v788, 1.442695
  %v790 = vpow.pop %v789
  %v791 = vsel %vm784, %v790, 0.0
  %792 = vadd.xlane.f32.xlu0 %v791
  %v793 = vpop.xlane.xlu0 %792
  %v794 = vlog2.pop %v793
  %v795 = vmul.f32 %v794, 0.6931472
  %v796 = vsub.f32 %v788, %v795
  %797 = vst.msk [vmem:[%s12] sm:$0x3f] %vm784, %v796
  // Predicated region
  $region50: #{forward.1} parent=0 // pred_check
    _
  $region51: #{forward.1} parent=0 // pred_check_branch
    %799 = sbr.rel (0) target = $region53
  $region52: #{forward.1} parent=0 // pred_region
    _
  $region53: #{forward.1} parent=0 // pred_fallthru
    _
  // Predicated region
  $region54: #{forward.1} parent=0 // pred_check
    _
  $region55: #{forward.1} parent=0 // pred_check_branch
    %801 = sbr.rel (0) target = $region57
  $region56: #{forward.1} parent=0 // pred_region
    _
  $region57: #{forward.1} parent=0 // pred_fallthru
    _

</llo_original>
